<compile_context>
chip_gen: v7x
topology: tpu7x:2x2x1
jax: 0.10.0
libtpu: 0.0.40
codegen_flags: <defaults>
</compile_context>

<pallas_src>
import functools

import jax
import jax.numpy as jnp
from jax.experimental import pallas as pl
from jax.experimental.pallas import tpu as pltpu

_LANE = 128
_SUBLANE = 8


def _round_up(x, m):
    return ((x + m - 1) // m) * m


def _default_num_splits():
    """2 row-splits only on chips with 2 TensorCores per device (v7x)."""
    try:
        kind = jax.devices()[0].device_kind.lower()
    except Exception:
        return 1
    return 2 if ("v7" in kind or "tpu7" in kind) else 1


def _dice_partial_kernel(logit_ref, truth_ref, inter_ref, union_ref, *,
                         blocks_per_split, tile_rows, rows_total,
                         w0, w1, apply_w, needs_mask):
    """Accumulates per-batch partial sums of (wp*wt) and (wp^2 + wt^2).

    Grid: (n_splits, blocks_per_split).  Axis 0 is 'parallel' (megacore split
    of the feature rows on v7x), axis 1 is the 'arbitrary' reduction over row
    blocks.  Each split owns its own lane-dense (1, B, 8, 128) output slab,
    which stays resident in VMEM across the reduction axis.
    """
    s = pl.program_id(0)
    k = pl.program_id(1)

    @pl.when(k == 0)
    def _():
        inter_ref[...] = jnp.zeros_like(inter_ref)
        union_ref[...] = jnp.zeros_like(union_ref)

    p = logit_ref[...].astype(jnp.float32)     # (B, tile_rows, 128)
    t = truth_ref[...].astype(jnp.float32)
    bb = logit_ref.shape[0]

    def accumulate(p, t):
        if apply_w:
            # General case: w = truth * (w1 - w0) + w0, applied per element.
            w = t * (w1 - w0) + w0
            p = w * p
            t = w * t
        # else: w is constant (w0); the epilogue scales the sums by w0**2 once.
        # View as (B, groups, 8, 128); summing over the group axis is pure
        # whole-vreg VPU adds (no per-step cross-sublane XLU reduce).
        pr = p.reshape(bb, tile_rows // _SUBLANE, _SUBLANE, _LANE)
        tr = t.reshape(bb, tile_rows // _SUBLANE, _SUBLANE, _LANE)
        inter_ref[...] += jnp.sum(pr * tr, axis=1).reshape(inter_ref.shape)
        union_ref[...] += jnp.sum(pr * pr + tr * tr, axis=1).reshape(union_ref.shape)

    if needs_mask:
        # Only the genuine tail block (or a clamped overhang block of an uneven
        # split) takes the masked branch; interior blocks pay zero mask cost.
        row_start = (s * blocks_per_split + k) * tile_rows
        is_tail = row_start + tile_rows > rows_total

        @pl.when(is_tail)
        def _():
            local = jax.lax.broadcasted_iota(jnp.int32, (1, tile_rows, _LANE), 1)
            valid = (row_start + local) < rows_total
            # Mask p/t BEFORE any arithmetic so garbage rows contribute exactly 0.
            accumulate(jnp.where(valid, p, 0.0), jnp.where(valid, t, 0.0))

        @pl.when(jnp.logical_not(is_tail))
        def _():
            accumulate(p, t)
    else:
        accumulate(p, t)


def weighted_dice_loss(logit, truth, weights=(0.5, 0.5), smooth=1e-5, *,
                       target_block_bytes=4 << 20, n_splits=None):
    """Pallas TPU equivalent of WeightedDiceLoss.forward."""
    assert logit.shape == truth.shape
    b = logit.shape[0]
    w0, w1 = float(weights[0]), float(weights[1])
    smooth = float(smooth)
    apply_w = (w0 != w1)

    # Flatten exactly like `.view(batch_size, -1)`.
    p = logit.reshape(b, -1)
    t = truth.reshape(b, -1)
    n = p.shape[1]

    # Lane alignment: only pad the (<=127-element) tail when N is not a
    # multiple of 128 (zeros contribute nothing).  For typical conv feature
    # maps N % 128 == 0 and the reshape below is zero-copy.
    if n % _LANE:
        pad = _LANE - n % _LANE
        p = jnp.pad(p, ((0, 0), (0, pad)))
        t = jnp.pad(t, ((0, 0), (0, pad)))
        n += pad
    rows = n // _LANE
    p = p.reshape(b, rows, _LANE)
    t = t.reshape(b, rows, _LANE)

    # tile_rows from an f32-equivalent element budget (~4 MiB): f32 inputs DMA
    # 4 MiB blocks, bf16 inputs 2 MiB blocks, keeping in-kernel f32
    # intermediates bounded regardless of input dtype.
    elem_budget = max(target_block_bytes // 4, b * _LANE * _SUBLANE)
    rows_budget = max(_SUBLANE, elem_budget // (b * _LANE))
    tile_rows = max(_SUBLANE, (rows_budget // _SUBLANE) * _SUBLANE)
    tile_rows = min(tile_rows, _round_up(rows, _SUBLANE))

    num_row_blocks = pl.cdiv(rows, tile_rows)
    if n_splits is None:
        n_splits = _default_num_splits()
    n_splits = max(1, min(int(n_splits), num_row_blocks))
    blocks_per_split = pl.cdiv(num_row_blocks, n_splits)
    # Static decision: does ANY block (tail or overhang) need row masking?
    needs_mask = (n_splits * blocks_per_split * tile_rows != rows)

    if n_splits * blocks_per_split == num_row_blocks:
        def in_map(s, k):
            return (0, s * blocks_per_split + k, 0)
    else:
        # Splits whose range hangs past the end re-read the last valid block;
        # those rows are fully masked to zero inside the kernel.
        def in_map(s, k):
            return (0, jnp.minimum(s * blocks_per_split + k, num_row_blocks - 1), 0)

    kernel = functools.partial(
        _dice_partial_kernel,
        blocks_per_split=blocks_per_split, tile_rows=tile_rows, rows_total=rows,
        w0=w0, w1=w1, apply_w=apply_w, needs_mask=needs_mask)

    out_struct = jax.ShapeDtypeStruct((n_splits, b, _SUBLANE, _LANE), jnp.float32)
    in_bytes = int(p.size) * int(jnp.dtype(p.dtype).itemsize) \
        + int(t.size) * int(jnp.dtype(t.dtype).itemsize)
    flops_per_elem = 8 + (3 if apply_w else 0)
    cost = pl.CostEstimate(
        flops=int(flops_per_elem * b * rows * _LANE),
        transcendentals=0,
        bytes_accessed=in_bytes + 2 * n_splits * b * _SUBLANE * _LANE * 4)

    inter_parts, union_parts = pl.pallas_call(
        kernel,
        out_shape=(out_struct, out_struct),
        grid_spec=pltpu.PrefetchScalarGridSpec(
            num_scalar_prefetch=0,
            grid=(n_splits, blocks_per_split),
            in_specs=[
                pl.BlockSpec((b, tile_rows, _LANE), in_map),
                pl.BlockSpec((b, tile_rows, _LANE), in_map),
            ],
            out_specs=[
                pl.BlockSpec((1, b, _SUBLANE, _LANE), lambda s, k: (s, 0, 0, 0)),
                pl.BlockSpec((1, b, _SUBLANE, _LANE), lambda s, k: (s, 0, 0, 0)),
            ],
        ),
        compiler_params=pltpu.CompilerParams(
            dimension_semantics=("parallel", "arbitrary"),
            vmem_limit_bytes=48 * 1024 * 1024),
        cost_estimate=cost,
    )(p, t)

    # Tiny epilogue in plain JAX: combine per-split, per-sublane/lane partials.
    inter = jnp.sum(inter_parts, axis=(0, 2, 3))   # (B,)
    union = jnp.sum(union_parts, axis=(0, 2, 3))   # (B,)
    if not apply_w:
        scale = w0 * w0                             # constant weight folded in once
        inter = inter * scale
        union = union * scale
    dice = 1.0 - (2.0 * inter + smooth) / (union + smooth)
    return jnp.mean(dice)


def _reference(logit, truth, weights=(0.5, 0.5), smooth=1e-5):
    b = logit.shape[0]
    p = logit.reshape(b, -1).astype(jnp.float32)
    t = truth.reshape(b, -1).astype(jnp.float32)
    w = t * (weights[1] - weights[0]) + weights[0]
    p = w * p
    t = w * t
    inter = jnp.sum(p * t, axis=-1)
    union = jnp.sum(p * p, axis=-1) + jnp.sum(t * t, axis=-1)
    dice = 1.0 - (2.0 * inter + smooth) / (union + smooth)
    return jnp.mean(dice)


if __name__ == "__main__":
    key = jax.random.PRNGKey(0)
    k1, k2, k3, k4, k5, k6 = jax.random.split(key, 6)

    # Case 1: NCHW inputs, batch=2, channels=4, spatial=16x16 (N=1024, lane
    # aligned, single block, no masking).
    logit = jax.nn.sigmoid(jax.random.normal(k1, (2, 4, 16, 16), jnp.float32))
    truth = (jax.random.uniform(k2, (2, 4, 16, 16)) > 0.5).astype(jnp.float32)
    loss = weighted_dice_loss(logit, truth)
    jax.block_until_ready(loss)
    ref = _reference(logit, truth)
    assert jnp.allclose(loss, ref, rtol=1e-5, atol=1e-6), (loss, ref)

    # Case 2: non-lane-aligned feature count + non-default weights (exercises
    # the lane pad path, the masked tail branch and the weighted compute path).
    logit2 = jax.nn.sigmoid(jax.random.normal(k3, (2, 3, 33, 33), jnp.float32))
    truth2 = (jax.random.uniform(k4, (2, 3, 33, 33)) > 0.5).astype(jnp.float32)
    loss2 = weighted_dice_loss(logit2, truth2, weights=(0.3, 0.7))
    jax.block_until_ready(loss2)
    ref2 = _reference(logit2, truth2, weights=(0.3, 0.7))
    assert jnp.allclose(loss2, ref2, rtol=1e-5, atol=1e-6), (loss2, ref2)

    # Case 3: forced small blocks + 2-way row split — exercises the multi-block
    # reduction, the unmasked interior branch, the pl.when-gated genuine tail
    # mask, and the fully-masked clamped overhang block of an uneven split.
    logit3 = jax.nn.sigmoid(jax.random.normal(k5, (2, 8, 100, 128), jnp.float32))
    truth3 = (jax.random.uniform(k6, (2, 8, 100, 128)) > 0.5).astype(jnp.float32)
    loss3 = weighted_dice_loss(logit3, truth3,
                               target_block_bytes=128 * 1024, n_splits=2)
    jax.block_until_ready(loss3)
    ref3 = _reference(logit3, truth3)
    assert jnp.allclose(loss3, ref3, rtol=1e-4, atol=1e-6), (loss3, ref3)

    print("KERNEL_OK")
</pallas_src>

<mosaic_0001>
module attributes {stable_mosaic.version = 11 : i64} {
  func.func @_dice_partial_kernel(%arg0: i32, %arg1: i32, %arg2: memref<2x8x128xf32, #tpu.memory_space<vmem>>, %arg3: memref<2x8x128xf32, #tpu.memory_space<vmem>>, %arg4: memref<1x2x8x128xf32, #tpu.memory_space<vmem>>, %arg5: memref<1x2x8x128xf32, #tpu.memory_space<vmem>>) attributes {dimension_semantics = [#tpu.dimension_semantics<parallel>, #tpu.dimension_semantics<arbitrary>], iteration_bounds = array<i64: 1, 1>, scalar_prefetch = 0 : i64, scratch_operands = 0 : i64, tpu.core_type = #tpu.core_type<tc>, window_params = [{transform_indices = @transform_0, window_bounds = array<i64: 2, 8, 128>}, {transform_indices = @transform_1, window_bounds = array<i64: 2, 8, 128>}, {transform_indices = @transform_2, window_bounds = array<i64: 1, 2, 8, 128>}, {transform_indices = @transform_3, window_bounds = array<i64: 1, 2, 8, 128>}]} {
    %c0_i32 = arith.constant 0 : i32
    %0 = arith.cmpi eq, %arg1, %c0_i32 : i32
    %1 = arith.extui %0 : i1 to i32
    %c0_i32_0 = arith.constant 0 : i32
    %2 = arith.cmpi ne, %1, %c0_i32_0 : i32
    scf.if %2 {
      %cst_23 = arith.constant 0.000000e+00 : f32
      %21 = vector.broadcast %cst_23 : f32 to vector<1x2x8x128xf32>
      %c0_24 = arith.constant 0 : index
      %c0_25 = arith.constant 0 : index
      %c0_26 = arith.constant 0 : index
      %c0_27 = arith.constant 0 : index
      %22 = vector.load %arg4[%c0_24, %c0_25, %c0_26, %c0_27] : memref<1x2x8x128xf32, #tpu.memory_space<vmem>>, vector<1x2x8x128xf32>
      tpu.vector_store %arg4[%c0_24, %c0_25, %c0_26, %c0_27], %21 {strides = array<i32>} : memref<1x2x8x128xf32, #tpu.memory_space<vmem>>, vector<1x2x8x128xf32>,
      %cst_28 = arith.constant 0.000000e+00 : f32
      %23 = vector.broadcast %cst_28 : f32 to vector<1x2x8x128xf32>
      %c0_29 = arith.constant 0 : index
      %c0_30 = arith.constant 0 : index
      %c0_31 = arith.constant 0 : index
      %c0_32 = arith.constant 0 : index
      %24 = vector.load %arg5[%c0_29, %c0_30, %c0_31, %c0_32] : memref<1x2x8x128xf32, #tpu.memory_space<vmem>>, vector<1x2x8x128xf32>
      tpu.vector_store %arg5[%c0_29, %c0_30, %c0_31, %c0_32], %23 {strides = array<i32>} : memref<1x2x8x128xf32, #tpu.memory_space<vmem>>, vector<1x2x8x128xf32>,
    } else {
    }
    %c0 = arith.constant 0 : index
    %c0_1 = arith.constant 0 : index
    %c0_2 = arith.constant 0 : index
    %3 = vector.load %arg2[%c0, %c0_1, %c0_2] : memref<2x8x128xf32, #tpu.memory_space<vmem>>, vector<2x8x128xf32>
    %c0_3 = arith.constant 0 : index
    %c0_4 = arith.constant 0 : index
    %c0_5 = arith.constant 0 : index
    %4 = vector.load %arg3[%c0_3, %c0_4, %c0_5] : memref<2x8x128xf32, #tpu.memory_space<vmem>>, vector<2x8x128xf32>
    %5 = vector.shape_cast %3 : vector<2x8x128xf32> to vector<2x1x8x128xf32>
    %6 = vector.shape_cast %4 : vector<2x8x128xf32> to vector<2x1x8x128xf32>
    %c0_6 = arith.constant 0 : index
    %c0_7 = arith.constant 0 : index
    %c0_8 = arith.constant 0 : index
    %c0_9 = arith.constant 0 : index
    %7 = vector.load %arg4[%c0_6, %c0_7, %c0_8, %c0_9] : memref<1x2x8x128xf32, #tpu.memory_space<vmem>>, vector<1x2x8x128xf32>
    %8 = arith.mulf %5, %6 : vector<2x1x8x128xf32>
    %cst = arith.constant dense<0.000000e+00> : vector<2x8x128xf32>
    %9 = vector.multi_reduction <add>, %8, %cst [1] : vector<2x1x8x128xf32> to vector<2x8x128xf32>
    %10 = vector.shape_cast %9 : vector<2x8x128xf32> to vector<1x2x8x128xf32>
    %11 = arith.addf %7, %10 : vector<1x2x8x128xf32>
    %c0_10 = arith.constant 0 : index
    %c0_11 = arith.constant 0 : index
    %c0_12 = arith.constant 0 : index
    %c0_13 = arith.constant 0 : index
    %12 = vector.load %arg4[%c0_10, %c0_11, %c0_12, %c0_13] : memref<1x2x8x128xf32, #tpu.memory_space<vmem>>, vector<1x2x8x128xf32>
    tpu.vector_store %arg4[%c0_10, %c0_11, %c0_12, %c0_13], %11 {strides = array<i32>} : memref<1x2x8x128xf32, #tpu.memory_space<vmem>>, vector<1x2x8x128xf32>,
    %c0_14 = arith.constant 0 : index
    %c0_15 = arith.constant 0 : index
    %c0_16 = arith.constant 0 : index
    %c0_17 = arith.constant 0 : index
    %13 = vector.load %arg5[%c0_14, %c0_15, %c0_16, %c0_17] : memref<1x2x8x128xf32, #tpu.memory_space<vmem>>, vector<1x2x8x128xf32>
    %14 = arith.mulf %5, %5 : vector<2x1x8x128xf32>
    %15 = arith.mulf %6, %6 : vector<2x1x8x128xf32>
    %16 = arith.addf %14, %15 : vector<2x1x8x128xf32>
    %cst_18 = arith.constant dense<0.000000e+00> : vector<2x8x128xf32>
    %17 = vector.multi_reduction <add>, %16, %cst_18 [1] : vector<2x1x8x128xf32> to vector<2x8x128xf32>
    %18 = vector.shape_cast %17 : vector<2x8x128xf32> to vector<1x2x8x128xf32>
    %19 = arith.addf %13, %18 : vector<1x2x8x128xf32>
    %c0_19 = arith.constant 0 : index
    %c0_20 = arith.constant 0 : index
    %c0_21 = arith.constant 0 : index
    %c0_22 = arith.constant 0 : index
    %20 = vector.load %arg5[%c0_19, %c0_20, %c0_21, %c0_22] : memref<1x2x8x128xf32, #tpu.memory_space<vmem>>, vector<1x2x8x128xf32>
    tpu.vector_store %arg5[%c0_19, %c0_20, %c0_21, %c0_22], %19 {strides = array<i32>} : memref<1x2x8x128xf32, #tpu.memory_space<vmem>>, vector<1x2x8x128xf32>,
    return
  }
  func.func @transform_0(%arg0: i32, %arg1: i32) -> (i32, i32, i32) {
    %c1_i32 = arith.constant 1 : i32
    %0 = arith.muli %arg0, %c1_i32 : i32
    %1 = arith.addi %0, %arg1 : i32
    %c0_i32 = arith.constant 0 : i32
    %c0_i32_0 = arith.constant 0 : i32
    %c0_i32_1 = arith.constant 0 : i32
    return %c0_i32, %1, %c0_i32_0 : i32, i32, i32
  }
  func.func @transform_1(%arg0: i32, %arg1: i32) -> (i32, i32, i32) {
    %c1_i32 = arith.constant 1 : i32
    %0 = arith.muli %arg0, %c1_i32 : i32
    %1 = arith.addi %0, %arg1 : i32
    %c0_i32 = arith.constant 0 : i32
    %c0_i32_0 = arith.constant 0 : i32
    %c0_i32_1 = arith.constant 0 : i32
    return %c0_i32, %1, %c0_i32_0 : i32, i32, i32
  }
  func.func @transform_2(%arg0: i32, %arg1: i32) -> (i32, i32, i32, i32) {
    %c0_i32 = arith.constant 0 : i32
    %c0_i32_0 = arith.constant 0 : i32
    %c0_i32_1 = arith.constant 0 : i32
    %c0_i32_2 = arith.constant 0 : i32
    return %arg0, %c0_i32, %c0_i32_0, %c0_i32_1 : i32, i32, i32, i32
  }
  func.func @transform_3(%arg0: i32, %arg1: i32) -> (i32, i32, i32, i32) {
    %c0_i32 = arith.constant 0 : i32
    %c0_i32_0 = arith.constant 0 : i32
    %c0_i32_1 = arith.constant 0 : i32
    %c0_i32_2 = arith.constant 0 : i32
    return %arg0, %c0_i32, %c0_i32_0, %c0_i32_1 : i32, i32, i32, i32
  }
}

</mosaic_0001>

<llo_original>
// kernel: tpu_custom_call.1
$region0: #{tpu_custom_call.1}
  #allocation0 [shape = 'u32[]', space=smem, size = 0x4, offset = 0x4, fixed_abs, tag = 'smem constant byte address 0x4 - core index']
  #allocation1 [shape = 'u32[144,128]{1,0:T(1,128)}', space=vmem, size = 0x12000, scoped, tag = 'internal scratch']
  %s0 = inlined_call_operand.hbm [shape: f32[2,8,128], index: 0, kind: input, shape index: {}]
  %s1 = inlined_call_operand.hbm [shape: f32[2,8,128], index: 1, kind: input, shape index: {}]
  %s2 = inlined_call_operand.hbm [shape: f32[1,2,8,128], index: 2, kind: output, shape index: {0}]
  %s3 = inlined_call_operand.hbm [shape: f32[1,2,8,128], index: 3, kind: output, shape index: {1}]
  %4 = xla_tuple %s2, %s3
  %s5 = sld [smem:[#allocation0]]
  $region38: #{tpu_custom_call.1} parent=0
    _
  %s7 = ssub.s32 1, %s5
  %s8 = scalar_select 0, %s7, %s5
  $region1: #{tpu_custom_call.1} parent=0
    #allocation2 [shape = 'u8[8192]{0}', space=vmem, size = 0x2000, scoped, tag = 'input window, operand 0, single buffered']
    #allocation3 [shape = 's32[1]{0}', space=sflag, size = 0x4, scoped, tag = 'scoped memory for tpu_custom_call.1']
    #allocation4 [shape = 's32[1]{0}', space=sflag, size = 0x4, scoped, tag = 'scoped memory for tpu_custom_call.1']
    #allocation5 [shape = 'u8[8192]{0}', space=vmem, size = 0x2000, scoped, tag = 'input window, operand 1, single buffered']
    #allocation6 [shape = 's32[1]{0}', space=sflag, size = 0x4, scoped, tag = 'scoped memory for tpu_custom_call.1']
    #allocation7 [shape = 'u8[8192]{0}', space=vmem, size = 0x2000, scoped, tag = 'output window, operand 0, single buffered']
    #allocation8 [shape = 'u8[8192]{0}', space=vmem, size = 0x2000, scoped, tag = 'output window, operand 1, single buffered']
    #allocation9 [shape = 's32[1]{0}', space=sflag, size = 0x4, scoped, tag = 'scoped memory for tpu_custom_call.1']
    %9 = vsyncpa [#allocation3], 0
    %10 = vsyncpa [#allocation6], 0
    %11 = vsyncpa [#allocation4], 0
    %12 = vsyncpa [#allocation9], 0
    // Predicated region
    $region2: #{tpu_custom_call.1} parent=1 // pred_check
      _
    $region3: #{tpu_custom_call.1} parent=1 // pred_check_branch
      %14 = sbr.rel (0) target = $region5
    $region4: #{tpu_custom_call.1} parent=1 // pred_region
      %s15 = sadd.s32 0, 0
      %s17 = ssub.s32 256, 256
      %18 = vsyncadd [#allocation3], %s17
      %s19 = smul.addr %s15, 128
      %s20 = scalar_lea.hbm %s0, %s19
      %s21 = sshll.u32 [#allocation2], 4
      %s22 = int_to_ptr.vmem [resolvable:$true] %s21
      %27 = dma.hbm_to_vmem [thread:$0]  %s20, 256, %s22, [#allocation3], 128, 128, 8
    $region5: #{tpu_custom_call.1} parent=1 // pred_fallthru
      _
    // Predicated region
    $region6: #{tpu_custom_call.1} parent=1 // pred_check
      _
    $region7: #{tpu_custom_call.1} parent=1 // pred_check_branch
      %29 = sbr.rel (0) target = $region9
    $region8: #{tpu_custom_call.1} parent=1 // pred_region
      %s30 = sadd.s32 0, 0
      %s32 = ssub.s32 256, 256
      %33 = vsyncadd [#allocation6], %s32
      %s34 = smul.addr %s30, 128
      %s35 = scalar_lea.hbm %s1, %s34
      %s36 = sshll.u32 [#allocation5], 4
      %s37 = int_to_ptr.vmem [resolvable:$true] %s36
      %42 = dma.hbm_to_vmem [thread:$0]  %s35, 256, %s37, [#allocation6], 128, 128, 8
    $region9: #{tpu_custom_call.1} parent=1 // pred_fallthru
      _
    // Predicated region
    $region10: #{tpu_custom_call.1} parent=1 // pred_check
      _
    $region11: #{tpu_custom_call.1} parent=1 // pred_check_branch
      %44 = sbr.rel (0) target = $region13
    $region12: #{tpu_custom_call.1} parent=1 // pred_region
      %45 = dma.done [#allocation3], 256
    $region13: #{tpu_custom_call.1} parent=1 // pred_fallthru
      _
    // Predicated region
    $region14: #{tpu_custom_call.1} parent=1 // pred_check
      _
    $region15: #{tpu_custom_call.1} parent=1 // pred_check_branch
      %47 = sbr.rel (0) target = $region17
    $region16: #{tpu_custom_call.1} parent=1 // pred_region
      %48 = dma.done [#allocation6], 256
    $region17: #{tpu_custom_call.1} parent=1 // pred_fallthru
      _
    %s49 = sadd.s32 0, 0
    %s50 = sadd.s32 0, 0
    %p51 = scmp.eq.s32.totalorder 0, 0
    // Predicated region
    $region18: #{tpu_custom_call.1} parent=1 // pred_check
      %p52 = pneg %p51
    $region19: #{tpu_custom_call.1} parent=1 // pred_check_branch
      %54 = sbr.rel (%p52) target = $region21
    $region20: #{tpu_custom_call.1} parent=1 // pred_region
      %55 = vst [vmem:[#allocation7] sm:$0xff] 0.0
      %56 = vst [vmem:[#allocation7 + $0x8] sm:$0xff] 0.0
      %57 = vst [vmem:[#allocation8] sm:$0xff] 0.0
      %58 = vst [vmem:[#allocation8 + $0x8] sm:$0xff] 0.0
    $region21: #{tpu_custom_call.1} parent=1 // pred_fallthru
      _
    %v59 = vld [vmem:[#allocation2] sm:$0xff]
    %v60 = vld [vmem:[#allocation2 + $0x8] sm:$0xff]
    %v61 = vld [vmem:[#allocation5] sm:$0xff]
    %v62 = vld [vmem:[#allocation5 + $0x8] sm:$0xff]
    %v63 = vld [vmem:[#allocation7] sm:$0xff]
    %v64 = vld [vmem:[#allocation7 + $0x8] sm:$0xff]
    %v65 = vmul.f32 %v59, %v61
    %v66 = vmul.f32 %v60, %v62
    %v67 = vadd.f32 %v65, 0.0
    %v68 = vadd.f32 %v66, 0.0
    %v69 = vadd.f32 %v63, %v67
    %v70 = vadd.f32 %v64, %v68
    %71 = vst [vmem:[#allocation7] sm:$0xff] %v69
    %72 = vst [vmem:[#allocation7 + $0x8] sm:$0xff] %v70
    %v73 = vld [vmem:[#allocation8] sm:$0xff]
    %v74 = vld [vmem:[#allocation8 + $0x8] sm:$0xff]
    %v75 = vmul.f32 %v59, %v59
    %v76 = vmul.f32 %v60, %v60
    %v77 = vmul.f32 %v61, %v61
    %v78 = vmul.f32 %v62, %v62
    %v79 = vadd.f32 %v75, %v77
    %v80 = vadd.f32 %v76, %v78
    %v81 = vadd.f32 %v79, 0.0
    %v82 = vadd.f32 %v80, 0.0
    %v83 = vadd.f32 %v73, %v81
    %v84 = vadd.f32 %v74, %v82
    %85 = vst [vmem:[#allocation8] sm:$0xff] %v83
    %86 = vst [vmem:[#allocation8 + $0x8] sm:$0xff] %v84
    // Predicated region
    $region22: #{tpu_custom_call.1} parent=1 // pred_check
      _
    $region23: #{tpu_custom_call.1} parent=1 // pred_check_branch
      %88 = sbr.rel (0) target = $region25
    $region24: #{tpu_custom_call.1} parent=1 // pred_region
      %s90 = ssub.s32 256, 256
      %91 = vsyncadd [#allocation4], %s90
      %s92 = sshll.u32 [#allocation7], 4
      %s93 = int_to_ptr.vmem [resolvable:$true] %s92
      %98 = dma.vmem_to_hbm [thread:$0]  %s93, 256, %s2, [#allocation4], 128, 128, 8
    $region25: #{tpu_custom_call.1} parent=1 // pred_fallthru
      _
    // Predicated region
    $region26: #{tpu_custom_call.1} parent=1 // pred_check
      _
    $region27: #{tpu_custom_call.1} parent=1 // pred_check_branch
      %100 = sbr.rel (0) target = $region29
    $region28: #{tpu_custom_call.1} parent=1 // pred_region
      %s102 = ssub.s32 256, 256
      %103 = vsyncadd [#allocation9], %s102
      %s104 = sshll.u32 [#allocation8], 4
      %s105 = int_to_ptr.vmem [resolvable:$true] %s104
      %110 = dma.vmem_to_hbm [thread:$0]  %s105, 256, %s3, [#allocation9], 128, 128, 8
    $region29: #{tpu_custom_call.1} parent=1 // pred_fallthru
      _
    // Predicated region
    $region30: #{tpu_custom_call.1} parent=1 // pred_check
      _
    $region31: #{tpu_custom_call.1} parent=1 // pred_check_branch
      %112 = sbr.rel (0) target = $region33
    $region32: #{tpu_custom_call.1} parent=1 // pred_region
      %113 = dma.done [#allocation4], 256
    $region33: #{tpu_custom_call.1} parent=1 // pred_fallthru
      _
    // Predicated region
    $region34: #{tpu_custom_call.1} parent=1 // pred_check
      _
    $region35: #{tpu_custom_call.1} parent=1 // pred_check_branch
      %115 = sbr.rel (0) target = $region37
    $region36: #{tpu_custom_call.1} parent=1 // pred_region
      %116 = dma.done [#allocation9], 256
    $region37: #{tpu_custom_call.1} parent=1 // pred_fallthru
      _
    %117 = vsyncpa [#allocation3], 1
    %118 = vsyncpa [#allocation6], 1
    %119 = vsyncpa [#allocation4], 1
    %120 = vsyncpa [#allocation9], 1

</llo_original>
